<compile_context>
chip_gen: v7x
topology: tpu7x:2x2x1
jax: 0.10.0
libtpu: 0.0.40
codegen_flags: <defaults>
</compile_context>

<pallas_src>
import math
import functools

import jax
import jax.numpy as jnp
from jax.experimental import pallas as pl
from jax.experimental.pallas import tpu as pltpu


def _lstm_chunk_kernel(xg_ref, whh_ref, y_ref, cn_ref, h_scr, c_scr, *, unroll):
    """One grid step = one chunk of Tc timesteps of the recurrence.

    xg_ref : (Tc, Bb, 4H)  precomputed x @ W_ih^T + bias (gate-permuted) chunk
    whh_ref: (H, 4H)       W_hh^T (gate-permuted), resident across the grid
    y_ref  : (Tc, Bb, H)   hidden-state outputs for this chunk
    cn_ref : (Bb, H)       final cell state (written on the last chunk)
    h_scr  : (Bb, H) VMEM  h carry across chunks (f32)
    c_scr  : (Bb, H) VMEM  c carry across chunks (f32)
    """
    chunk = pl.program_id(1)
    n_chunks = pl.num_programs(1)
    Tc = xg_ref.shape[0]
    H = h_scr.shape[-1]

    @pl.when(chunk == 0)
    def _():
        h_scr[...] = jnp.zeros_like(h_scr)
        c_scr[...] = jnp.zeros_like(c_scr)

    # Resident recurrent weight, hoisted out of the step loop.  bf16 on the
    # serial MXU path when mxu_bf16 (f32 carries / f32 accumulate kept).
    whh = whh_ref[...]                       # (H, 4H)
    compute_dtype = whh.dtype

    def step(t, carry):
        h_prev, c_prev = carry               # f32 carries
        # Only the recurrent projection sits on the serial path; the
        # x-projection (incl. bias) was hoisted into one big matmul outside.
        rec = jnp.dot(h_prev.astype(compute_dtype), whh,
                      preferred_element_type=jnp.float32)          # (Bb, 4H)
        gates = xg_ref[t].astype(jnp.float32) + rec                # (Bb, 4H)

        # Gate order along 4H was permuted in the wrapper to [i, f, o, g]:
        # one 3H-wide sigmoid + one H-wide tanh covers all gates (EUP work
        # halved vs. full-width sigmoid AND tanh).
        sig = jax.nn.sigmoid(gates[:, : 3 * H])
        g_g = jnp.tanh(gates[:, 3 * H:])
        i_g = sig[:, 0 * H:1 * H]
        f_g = sig[:, 1 * H:2 * H]
        o_g = sig[:, 2 * H:3 * H]

        c_new = f_g * c_prev + i_g * g_g
        h_new = o_g * jnp.tanh(c_new)

        y_ref[t] = h_new.astype(y_ref.dtype)
        return (h_new, c_new)

    # Partial unroll: bounded vreg pressure, LLO still sees several steps.
    h_last, c_last = jax.lax.fori_loop(
        0, Tc, step, (h_scr[...], c_scr[...]), unroll=unroll)

    h_scr[...] = h_last
    c_scr[...] = c_last

    @pl.when(chunk == n_chunks - 1)
    def _():
        cn_ref[...] = c_last.astype(cn_ref.dtype)


@functools.partial(
    jax.jit,
    static_argnames=("weight_drop", "time_chunk", "batch_blocks", "mxu_bf16"))
def weight_drop_lstm_forward(x, w_ih, w_hh, b_ih, b_hh, *,
                             weight_drop=0.0, time_chunk=None,
                             batch_blocks=1, mxu_bf16=True):
    """x: (T, B, D) float32.  Weights in PyTorch layout:
       w_ih: (4H, D), w_hh: (4H, H), b_ih / b_hh: (4H,).
       Returns (y, (h_n, c_n)) matching torch.nn.LSTM with zero initial state.
       weight_drop is inference-identity (F.dropout with training=False)."""
    del weight_drop  # identity at inference; see TODO(synk) above.
    T, B, D = x.shape
    H = w_hh.shape[1]
    G = 4 * H

    assert B % batch_blocks == 0, "batch_blocks must divide B"
    Bb = B // batch_blocks

    # ---- Gate permutation: PyTorch order [i, f, g, o] -> [i, f, o, g] so the
    # kernel runs one 3H-wide sigmoid + one H-wide tanh per step. ----
    perm = jnp.concatenate([jnp.arange(0, 2 * H),
                            jnp.arange(3 * H, 4 * H),
                            jnp.arange(2 * H, 3 * H)])
    w_ih_p = w_ih[perm].astype(jnp.float32)                 # (4H, D)
    w_hh_p = w_hh[perm].astype(jnp.float32)                 # (4H, H)
    bias_p = (b_ih + b_hh)[perm].astype(jnp.float32)        # (4H,)

    # ---- Hoisted, time-parallel input projection (one big MXU matmul). ----
    xg = (x.astype(jnp.float32).reshape(T * B, D) @ w_ih_p.T
          + bias_p).reshape(T, B, G)

    # bf16 on the MXU / streamed-xg path (f32 carries + f32 accumulate kept);
    # f32 path retained for bit-tight verification.
    stream_dtype = jnp.bfloat16 if mxu_bf16 else jnp.float32
    xg = xg.astype(stream_dtype)
    whh_t = w_hh_p.T.astype(stream_dtype)                   # (H, 4H), resident
    item = jnp.dtype(stream_dtype).itemsize

    # ---- Time-chunk selection: >= 4 chunks for pipelining, bounded VMEM. ----
    if time_chunk is None:
        # Double-buffered xg chunk + double-buffered y chunk, per timestep.
        bytes_per_step = Bb * (2 * G * item + 2 * H * 4)
        budget = 40 * 1024 * 1024          # safe under v7x's 64 MiB VMEM/TC
        tc_cap = max(1, budget // max(1, bytes_per_step))
        tc = int(min(T, tc_cap, max(1, T // 4)))
        while T % tc:
            tc -= 1
        Tc = tc
    else:
        Tc = int(time_chunk)
    assert T % Tc == 0, "time_chunk must divide T"
    n_chunks = T // Tc

    # Explicit VMEM budget derived from the actual footprint (generation-safe).
    vmem_needed = (2 * Tc * Bb * G * item          # xg chunks (double-buffered)
                   + 2 * Tc * Bb * H * 4           # y chunks  (double-buffered)
                   + 2 * H * G * item              # resident W_hh^T
                   + 6 * Bb * H * 4)               # c_n out + h/c carries
    vmem_limit = int(min(100 * 1024 * 1024,
                         max(32 * 1024 * 1024, 2 * vmem_needed)))

    out_shapes = (
        jax.ShapeDtypeStruct((T, B, H), jnp.float32),   # y
        jax.ShapeDtypeStruct((B, H), jnp.float32),      # c_n
    )

    grid_spec = pltpu.PrefetchScalarGridSpec(
        num_scalar_prefetch=0,
        grid=(batch_blocks, n_chunks),                  # batch parallel, time serial
        in_specs=[
            pl.BlockSpec((Tc, Bb, G), lambda b, c: (c, b, 0)),   # xg chunk
            pl.BlockSpec((H, G), lambda b, c: (0, 0)),           # W_hh^T resident
        ],
        out_specs=[
            pl.BlockSpec((Tc, Bb, H), lambda b, c: (c, b, 0)),   # y chunk slab
            pl.BlockSpec((Bb, H), lambda b, c: (b, 0)),          # c_n
        ],
        scratch_shapes=[
            pltpu.VMEM((Bb, H), jnp.float32),  # h carry (persists across chunks)
            pltpu.VMEM((Bb, H), jnp.float32),  # c carry
        ],
    )

    kernel = functools.partial(_lstm_chunk_kernel, unroll=min(8, Tc))

    y, c_n = pl.pallas_call(
        kernel,
        out_shape=out_shapes,
        grid_spec=grid_spec,
        compiler_params=pltpu.CompilerParams(
            # Batch rows are independent (v7x megacore split); the time /
            # recurrence axis is inherently sequential.
            dimension_semantics=("parallel", "arbitrary"),
            vmem_limit_bytes=vmem_limit,
        ),
    )(xg, whh_t)

    h_n = y[-1]                      # final hidden state == last output row
    return y, (h_n[None], c_n[None])  # (1, B, H) like PyTorch


def _reference_lstm(x, w_ih, w_hh, b_ih, b_hh):
    """Pure-JAX reference (lax.scan) for correctness checking."""
    T, B, D = x.shape
    H = w_hh.shape[1]
    b = b_ih + b_hh

    def step(carry, x_t):
        h, c = carry
        gates = x_t @ w_ih.T + h @ w_hh.T + b
        i = jax.nn.sigmoid(gates[:, 0 * H:1 * H])
        f = jax.nn.sigmoid(gates[:, 1 * H:2 * H])
        g = jnp.tanh(gates[:, 2 * H:3 * H])
        o = jax.nn.sigmoid(gates[:, 3 * H:4 * H])
        c_new = f * c + i * g
        h_new = o * jnp.tanh(c_new)
        return (h_new, c_new), h_new

    init = (jnp.zeros((B, H), jnp.float32), jnp.zeros((B, H), jnp.float32))
    (h_n, c_n), ys = jax.lax.scan(step, init, x)
    return ys, (h_n[None], c_n[None])


if __name__ == "__main__":
    # Small shapes consistent with the module: seq=8, batch=2, input=16, hidden=32.
    # With T=8 the auto chunker picks Tc=2 -> grid=(1, 4): exercises the
    # multi-chunk pipelined path and the cross-chunk h/c carry.
    T, B, D, H = 8, 2, 16, 32

    key = jax.random.PRNGKey(0)
    k_x, k_wih, k_whh, k_bih, k_bhh = jax.random.split(key, 5)

    stdv = 1.0 / math.sqrt(H)
    w_ih = jax.random.uniform(k_wih, (4 * H, D), jnp.float32, -stdv, stdv)
    w_hh = jax.random.uniform(k_whh, (4 * H, H), jnp.float32, -stdv, stdv)
    b_ih = jax.random.uniform(k_bih, (4 * H,), jnp.float32, -stdv, stdv)
    b_hh = jax.random.uniform(k_bhh, (4 * H,), jnp.float32, -stdv, stdv)

    x = jax.random.normal(k_x, (T, B, D), jnp.float32)

    y_ref, (h_ref, c_ref) = _reference_lstm(x, w_ih, w_hh, b_ih, b_hh)

    # 1) f32 path: bit-tight check against the reference.
    y32, (h32, c32) = weight_drop_lstm_forward(
        x, w_ih, w_hh, b_ih, b_hh, mxu_bf16=False)
    jax.block_until_ready((y32, h32, c32))
    assert jnp.allclose(y32, y_ref, atol=1e-5, rtol=1e-5), "f32 output mismatch"
    assert jnp.allclose(h32, h_ref, atol=1e-5, rtol=1e-5), "f32 h_n mismatch"
    assert jnp.allclose(c32, c_ref, atol=1e-5, rtol=1e-5), "f32 c_n mismatch"

    # 2) bf16-MXU path (performance default): loose tolerance vs. f32 reference.
    y16, (h16, c16) = weight_drop_lstm_forward(
        x, w_ih, w_hh, b_ih, b_hh, mxu_bf16=True)
    jax.block_until_ready((y16, h16, c16))
    assert jnp.allclose(y16, y_ref, atol=2e-2, rtol=2e-2), "bf16 output mismatch"
    assert jnp.allclose(h16, h_ref, atol=2e-2, rtol=2e-2), "bf16 h_n mismatch"
    assert jnp.allclose(c16, c_ref, atol=5e-2, rtol=5e-2), "bf16 c_n mismatch"

    print("KERNEL_OK")
</pallas_src>

<mosaic_0001>
module attributes {stable_mosaic.version = 11 : i64} {
  func.func @_lstm_chunk_kernel(%arg0: i32, %arg1: i32, %arg2: memref<2x2x128xf32, #tpu.memory_space<vmem>>, %arg3: memref<32x128xf32, #tpu.memory_space<vmem>>, %arg4: memref<2x2x32xf32, #tpu.memory_space<vmem>>, %arg5: memref<2x32xf32, #tpu.memory_space<vmem>>, %arg6: memref<2x32xf32, #tpu.memory_space<vmem>>, %arg7: memref<2x32xf32, #tpu.memory_space<vmem>>) attributes {dimension_semantics = [#tpu.dimension_semantics<parallel>, #tpu.dimension_semantics<arbitrary>], iteration_bounds = array<i64: 1, 4>, scalar_prefetch = 0 : i64, scratch_operands = 2 : i64, tpu.core_type = #tpu.core_type<tc>, window_params = [{transform_indices = @transform_0, window_bounds = array<i64: 2, 2, 128>}, {pipeline_mode = #tpu.pipeline_mode<synchronous>, transform_indices = @transform_1, window_bounds = array<i64: 32, 128>}, {transform_indices = @transform_2, window_bounds = array<i64: 2, 2, 32>}, {transform_indices = @transform_3, window_bounds = array<i64: 2, 32>}]} {
    %c0_i32 = arith.constant 0 : i32
    %0 = arith.cmpi eq, %arg1, %c0_i32 : i32
    %1 = arith.extui %0 : i1 to i32
    %c0_i32_0 = arith.constant 0 : i32
    %2 = arith.cmpi ne, %1, %c0_i32_0 : i32
    scf.if %2 {
      %cst_23 = arith.constant 0.000000e+00 : f32
      %61 = vector.broadcast %cst_23 : f32 to vector<2x32xf32>
      %c0_24 = arith.constant 0 : index
      %c0_25 = arith.constant 0 : index
      %62 = vector.load %arg6[%c0_24, %c0_25] : memref<2x32xf32, #tpu.memory_space<vmem>>, vector<2x32xf32>
      tpu.vector_store %arg6[%c0_24, %c0_25], %61 {strides = array<i32>} : memref<2x32xf32, #tpu.memory_space<vmem>>, vector<2x32xf32>,
      %cst_26 = arith.constant 0.000000e+00 : f32
      %63 = vector.broadcast %cst_26 : f32 to vector<2x32xf32>
      %c0_27 = arith.constant 0 : index
      %c0_28 = arith.constant 0 : index
      %64 = vector.load %arg7[%c0_27, %c0_28] : memref<2x32xf32, #tpu.memory_space<vmem>>, vector<2x32xf32>
      tpu.vector_store %arg7[%c0_27, %c0_28], %63 {strides = array<i32>} : memref<2x32xf32, #tpu.memory_space<vmem>>, vector<2x32xf32>,
    } else {
    }
    %c0 = arith.constant 0 : index
    %c0_1 = arith.constant 0 : index
    %3 = vector.load %arg3[%c0, %c0_1] : memref<32x128xf32, #tpu.memory_space<vmem>>, vector<32x128xf32>
    %c0_2 = arith.constant 0 : index
    %c0_3 = arith.constant 0 : index
    %4 = vector.load %arg6[%c0_2, %c0_3] : memref<2x32xf32, #tpu.memory_space<vmem>>, vector<2x32xf32>
    %c0_4 = arith.constant 0 : index
    %c0_5 = arith.constant 0 : index
    %5 = vector.load %arg7[%c0_4, %c0_5] : memref<2x32xf32, #tpu.memory_space<vmem>>, vector<2x32xf32>
    %c0_i32_6 = arith.constant 0 : i32
    %cst = arith.constant dense<0.000000e+00> : vector<2x128xf32>
    %6 = tpu.matmul %4, %3, %cst {dimension_numbers = #tpu.dot_dimension_numbers<[1], [0], [0], [1], [0, 0, 1, 1], [], []>} : vector<2x32xf32>, vector<32x128xf32>, vector<2x128xf32> -> vector<2x128xf32>
    %7 = arith.index_cast %c0_i32_6 : i32 to index
    %c0_7 = arith.constant 0 : index
    %c0_8 = arith.constant 0 : index
    %8 = vector.load %arg2[%7, %c0_7, %c0_8] : memref<2x2x128xf32, #tpu.memory_space<vmem>>, vector<1x2x128xf32>
    %9 = vector.shape_cast %8 : vector<1x2x128xf32> to vector<2x128xf32>
    %10 = arith.addf %9, %6 : vector<2x128xf32>
    %11 = vector.extract_strided_slice %10 {offsets = [0, 0], sizes = [2, 96], strides = [1, 1]} : vector<2x128xf32> to vector<2x96xf32>
    %12 = arith.negf %11 : vector<2x96xf32>
    %13 = math.exp %12 : vector<2x96xf32>
    %cst_9 = arith.constant 1.000000e+00 : f32
    %14 = vector.broadcast %cst_9 : f32 to vector<2x96xf32>
    %15 = arith.addf %14, %13 : vector<2x96xf32>
    %16 = arith.divf %14, %15 : vector<2x96xf32>
    %17 = vector.extract_strided_slice %10 {offsets = [0, 96], sizes = [2, 32], strides = [1, 1]} : vector<2x128xf32> to vector<2x32xf32>
    %18 = math.tanh %17 : vector<2x32xf32>
    %19 = vector.extract_strided_slice %16 {offsets = [0, 0], sizes = [2, 32], strides = [1, 1]} : vector<2x96xf32> to vector<2x32xf32>
    %20 = vector.extract_strided_slice %16 {offsets = [0, 32], sizes = [2, 32], strides = [1, 1]} : vector<2x96xf32> to vector<2x32xf32>
    %21 = vector.extract_strided_slice %16 {offsets = [0, 64], sizes = [2, 32], strides = [1, 1]} : vector<2x96xf32> to vector<2x32xf32>
    %22 = arith.mulf %20, %5 : vector<2x32xf32>
    %23 = arith.mulf %19, %18 : vector<2x32xf32>
    %24 = arith.addf %22, %23 : vector<2x32xf32>
    %25 = math.tanh %24 : vector<2x32xf32>
    %26 = arith.mulf %21, %25 : vector<2x32xf32>
    %27 = arith.index_cast %c0_i32_6 : i32 to index
    %c0_10 = arith.constant 0 : index
    %c0_11 = arith.constant 0 : index
    %28 = vector.load %arg4[%27, %c0_10, %c0_11] : memref<2x2x32xf32, #tpu.memory_space<vmem>>, vector<1x2x32xf32>
    %29 = vector.shape_cast %28 : vector<1x2x32xf32> to vector<2x32xf32>
    %30 = vector.shape_cast %26 : vector<2x32xf32> to vector<1x2x32xf32>
    tpu.vector_store %arg4[%27, %c0_10, %c0_11], %30 {strides = array<i32>} : memref<2x2x32xf32, #tpu.memory_space<vmem>>, vector<1x2x32xf32>,
    %c1_i32 = arith.constant 1 : i32
    %cst_12 = arith.constant dense<0.000000e+00> : vector<2x128xf32>
    %31 = tpu.matmul %26, %3, %cst_12 {dimension_numbers = #tpu.dot_dimension_numbers<[1], [0], [0], [1], [0, 0, 1, 1], [], []>} : vector<2x32xf32>, vector<32x128xf32>, vector<2x128xf32> -> vector<2x128xf32>
    %32 = arith.index_cast %c1_i32 : i32 to index
    %c0_13 = arith.constant 0 : index
    %c0_14 = arith.constant 0 : index
    %33 = vector.load %arg2[%32, %c0_13, %c0_14] : memref<2x2x128xf32, #tpu.memory_space<vmem>>, vector<1x2x128xf32>
    %34 = vector.shape_cast %33 : vector<1x2x128xf32> to vector<2x128xf32>
    %35 = arith.addf %34, %31 : vector<2x128xf32>
    %36 = vector.extract_strided_slice %35 {offsets = [0, 0], sizes = [2, 96], strides = [1, 1]} : vector<2x128xf32> to vector<2x96xf32>
    %37 = arith.negf %36 : vector<2x96xf32>
    %38 = math.exp %37 : vector<2x96xf32>
    %cst_15 = arith.constant 1.000000e+00 : f32
    %39 = vector.broadcast %cst_15 : f32 to vector<2x96xf32>
    %40 = arith.addf %39, %38 : vector<2x96xf32>
    %41 = arith.divf %39, %40 : vector<2x96xf32>
    %42 = vector.extract_strided_slice %35 {offsets = [0, 96], sizes = [2, 32], strides = [1, 1]} : vector<2x128xf32> to vector<2x32xf32>
    %43 = math.tanh %42 : vector<2x32xf32>
    %44 = vector.extract_strided_slice %41 {offsets = [0, 0], sizes = [2, 32], strides = [1, 1]} : vector<2x96xf32> to vector<2x32xf32>
    %45 = vector.extract_strided_slice %41 {offsets = [0, 32], sizes = [2, 32], strides = [1, 1]} : vector<2x96xf32> to vector<2x32xf32>
    %46 = vector.extract_strided_slice %41 {offsets = [0, 64], sizes = [2, 32], strides = [1, 1]} : vector<2x96xf32> to vector<2x32xf32>
    %47 = arith.mulf %45, %24 : vector<2x32xf32>
    %48 = arith.mulf %44, %43 : vector<2x32xf32>
    %49 = arith.addf %47, %48 : vector<2x32xf32>
    %50 = math.tanh %49 : vector<2x32xf32>
    %51 = arith.mulf %46, %50 : vector<2x32xf32>
    %52 = arith.index_cast %c1_i32 : i32 to index
    %c0_16 = arith.constant 0 : index
    %c0_17 = arith.constant 0 : index
    %53 = vector.load %arg4[%52, %c0_16, %c0_17] : memref<2x2x32xf32, #tpu.memory_space<vmem>>, vector<1x2x32xf32>
    %54 = vector.shape_cast %53 : vector<1x2x32xf32> to vector<2x32xf32>
    %55 = vector.shape_cast %51 : vector<2x32xf32> to vector<1x2x32xf32>
    tpu.vector_store %arg4[%52, %c0_16, %c0_17], %55 {strides = array<i32>} : memref<2x2x32xf32, #tpu.memory_space<vmem>>, vector<1x2x32xf32>,
    %c2_i32 = arith.constant 2 : i32
    %c0_18 = arith.constant 0 : index
    %c0_19 = arith.constant 0 : index
    %56 = vector.load %arg6[%c0_18, %c0_19] : memref<2x32xf32, #tpu.memory_space<vmem>>, vector<2x32xf32>
    tpu.vector_store %arg6[%c0_18, %c0_19], %51 {strides = array<i32>} : memref<2x32xf32, #tpu.memory_space<vmem>>, vector<2x32xf32>,
    %c0_20 = arith.constant 0 : index
    %c0_21 = arith.constant 0 : index
    %57 = vector.load %arg7[%c0_20, %c0_21] : memref<2x32xf32, #tpu.memory_space<vmem>>, vector<2x32xf32>
    tpu.vector_store %arg7[%c0_20, %c0_21], %49 {strides = array<i32>} : memref<2x32xf32, #tpu.memory_space<vmem>>, vector<2x32xf32>,
    %c3_i32 = arith.constant 3 : i32
    %58 = arith.cmpi eq, %arg1, %c3_i32 : i32
    %59 = arith.extui %58 : i1 to i32
    %c0_i32_22 = arith.constant 0 : i32
    %60 = arith.cmpi ne, %59, %c0_i32_22 : i32
    scf.if %60 {
      %c0_23 = arith.constant 0 : index
      %c0_24 = arith.constant 0 : index
      %61 = vector.load %arg5[%c0_23, %c0_24] : memref<2x32xf32, #tpu.memory_space<vmem>>, vector<2x32xf32>
      tpu.vector_store %arg5[%c0_23, %c0_24], %49 {strides = array<i32>} : memref<2x32xf32, #tpu.memory_space<vmem>>, vector<2x32xf32>,
    } else {
    }
    return
  }
  func.func @transform_0(%arg0: i32, %arg1: i32) -> (i32, i32, i32) {
    %c0_i32 = arith.constant 0 : i32
    %c0_i32_0 = arith.constant 0 : i32
    return %arg1, %arg0, %c0_i32 : i32, i32, i32
  }
  func.func @transform_1(%arg0: i32, %arg1: i32) -> (i32, i32) {
    %c0_i32 = arith.constant 0 : i32
    %c0_i32_0 = arith.constant 0 : i32
    %c0_i32_1 = arith.constant 0 : i32
    return %c0_i32, %c0_i32_0 : i32, i32
  }
  func.func @transform_2(%arg0: i32, %arg1: i32) -> (i32, i32, i32) {
    %c0_i32 = arith.constant 0 : i32
    %c0_i32_0 = arith.constant 0 : i32
    return %arg1, %arg0, %c0_i32 : i32, i32, i32
  }
  func.func @transform_3(%arg0: i32, %arg1: i32) -> (i32, i32) {
    %c0_i32 = arith.constant 0 : i32
    %c0_i32_0 = arith.constant 0 : i32
    return %arg0, %c0_i32 : i32, i32
  }
}

</mosaic_0001>

<llo_original>
// kernel: weight_drop_lstm_forward.1
$region0: #{weight_drop_lstm_forward.1}
  #allocation0 [shape = 'u32[]', space=smem, size = 0x4, offset = 0x4, fixed_abs, tag = 'smem constant byte address 0x4 - core index']
  #allocation1 [shape = 'u32[144,128]{1,0:T(1,128)}', space=vmem, size = 0x12000, scoped, tag = 'internal scratch']
  #allocation2 [shape = 'f32[2,32]{1,0:T(2,128)}', space=vmem, size = 0x400, scoped, tag = 'scratch operand']
  #allocation3 [shape = 'f32[2,32]{1,0:T(2,128)}', space=vmem, size = 0x400, scoped, tag = 'scratch operand']
  %s0 = inlined_call_operand.vmem [shape: f32[8,2,128], index: 0, kind: input, shape index: {}]
  %s1 = inlined_call_operand.vmem [shape: f32[32,128], index: 1, kind: input, shape index: {}]
  %s2 = inlined_call_operand.vmem [shape: f32[8,2,32], index: 2, kind: output, shape index: {0}]
  %s3 = inlined_call_operand.hbm [shape: f32[2,32], index: 3, kind: output, shape index: {1}]
  %4 = xla_tuple %s2, %s3
  %s5 = sld [smem:[#allocation0]]
  $region57: #{weight_drop_lstm_forward.1} parent=0
    _
  %s7 = ssub.s32 1, %s5
  %s8 = scalar_select 0, %s7, %s5
  $region1: #{weight_drop_lstm_forward.1} parent=0
    #allocation4 [shape = 'u8[1024]{0}', space=vmem, size = 0x400, scoped, tag = 'output window, operand 1, single buffered']
    #allocation5 [shape = 's32[2]{0}', space=sflag, size = 0x8, scoped, tag = 'scoped memory for weight_drop_lstm_forward.1']
    %9 = vsyncpa [#allocation5], 0
    loop: start=0, step=1, limit=6
    $region2: #{weight_drop_lstm_forward.1} parent=1 // loop_pre_header
      _
    $region3: #{weight_drop_lstm_forward.1} parent=1 // loop_header
      %s11 = sphi 0, %s15
      %p12 = scmp.ge.s32.totalorder %s11, 6
      %s18 = sphi 0, %s30
      %s19 = sphi 0, %s26
      %s20 = sphi 0, %s18
      %s21 = sphi 0, %s19
      %s22 = sphi 0, %s20
      %s23 = sphi 0, %s21
      %s35 = sphi 0, %s37
      %s38 = sphi 0, %s35
      %s39 = sphi 0, %s38
      %s55 = sphi 0, %s39
      %s59 = sphi 0, %s59
      %s61 = sphi 0, %s59
      %s62 = sphi 0, %s61
      %s76 = sphi 0, %s62
      %s84 = sphi 0, %s86
      %s87 = sphi 0, %s84
      %s88 = sphi 0, %s87
      %s104 = sphi 0, %s88
      %s110 = sphi 0, %s112
      %s113 = sphi 0, %s110
      %s114 = sphi 0, %s113
      %s130 = sphi 0, %s114
    $region4: #{weight_drop_lstm_forward.1} parent=1 // loop_header_branch
      %14 = sbr.rel (%p12) target = $region8
    $region5: #{weight_drop_lstm_forward.1} parent=1 // loop_body
      %s16 = ssub.s32 %s11, 1
      %s17 = ssub.s32 %s11, 2
      %s24 = sadd.s32 1, %s19
      %p25 = scmp.ge.s32.totalorder %s24, 4
      %s26 = scalar_select %p25, 0, %s24
      %s27 = sadd.s32 1, %s18
      %s28 = scalar_select %p25, %s27, %s18
      %p29 = scmp.ge.s32.totalorder %s28, 1
      %s30 = scalar_select %p29, 0, %s28
      %s31 = ssub.s32 %s19, %s26
      %s32 = ssub.s32 %s18, %s30
      %s33 = sor.u32 %s31, %s32
      %p34 = scmp.eq.s32.totalorder %s33, 0
      %s36 = sadd.s32 %s35, 1
      %s37 = scalar_select %p34, %s35, %s36
      %p40 = pneg %p34
      %p41 = scmp.eq.s32.totalorder %s11, 3
      %p42 = por %p40, %p41
      %p43 = scmp.ne.s32.totalorder %s35, %s38
      %p44 = scmp.eq.s32.totalorder %s11, 0
      %p45 = por %p43, %p44
      %p46 = scmp.ne.s32.totalorder %s35, %s38
      %p47 = scmp.eq.s32.totalorder %s16, 3
      %p48 = por %p46, %p47
      %p49 = scmp.ne.s32.totalorder %s38, %s39
      %p50 = scmp.eq.s32.totalorder %s16, 0
      %p51 = por %p49, %p50
      %p52 = scmp.ne.s32.totalorder %s38, %s39
      %p53 = scmp.eq.s32.totalorder %s17, 3
      %p54 = por %p52, %p53
      %p56 = scmp.ne.s32.totalorder %s39, %s55
      %p57 = scmp.eq.s32.totalorder %s17, 0
      %p58 = por %p56, %p57
      %s60 = sadd.s32 %s59, 1
      %p63 = scmp.eq.s32.totalorder %s11, 3
      %p64 = scmp.ne.s32.totalorder %s59, %s61
      %p65 = scmp.eq.s32.totalorder %s11, 0
      %p66 = por %p64, %p65
      %p67 = scmp.ne.s32.totalorder %s59, %s61
      %p68 = scmp.eq.s32.totalorder %s16, 3
      %p69 = por %p67, %p68
      %p70 = scmp.ne.s32.totalorder %s61, %s62
      %p71 = scmp.eq.s32.totalorder %s16, 0
      %p72 = por %p70, %p71
      %p73 = scmp.ne.s32.totalorder %s61, %s62
      %p74 = scmp.eq.s32.totalorder %s17, 3
      %p75 = por %p73, %p74
      %p77 = scmp.ne.s32.totalorder %s62, %s76
      %p78 = scmp.eq.s32.totalorder %s17, 0
      %p79 = por %p77, %p78
      %s80 = ssub.s32 %s19, %s26
      %s81 = ssub.s32 %s18, %s30
      %s82 = sor.u32 %s80, %s81
      %p83 = scmp.eq.s32.totalorder %s82, 0
      %s85 = sadd.s32 %s84, 1
      %s86 = scalar_select %p83, %s84, %s85
      %p89 = pneg %p83
      %p90 = scmp.eq.s32.totalorder %s11, 3
      %p91 = por %p89, %p90
      %p92 = scmp.ne.s32.totalorder %s84, %s87
      %p93 = scmp.eq.s32.totalorder %s11, 0
      %p94 = por %p92, %p93
      %p95 = scmp.ne.s32.totalorder %s84, %s87
      %p96 = scmp.eq.s32.totalorder %s16, 3
      %p97 = por %p95, %p96
      %p98 = scmp.ne.s32.totalorder %s87, %s88
      %p99 = scmp.eq.s32.totalorder %s16, 0
      %p100 = por %p98, %p99
      %p101 = scmp.ne.s32.totalorder %s87, %s88
      %p102 = scmp.eq.s32.totalorder %s17, 3
      %p103 = por %p101, %p102
      %p105 = scmp.ne.s32.totalorder %s88, %s104
      %p106 = scmp.eq.s32.totalorder %s17, 0
      %p107 = por %p105, %p106
      %s108 = ssub.s32 %s18, %s30
      %p109 = scmp.eq.s32.totalorder %s108, 0
      %s111 = sadd.s32 %s110, 1
      %s112 = scalar_select %p109, %s110, %s111
      %p115 = pneg %p109
      %p116 = scmp.eq.s32.totalorder %s11, 3
      %p117 = por %p115, %p116
      %p118 = scmp.ne.s32.totalorder %s110, %s113
      %p119 = scmp.eq.s32.totalorder %s11, 0
      %p120 = por %p118, %p119
      %p121 = scmp.ne.s32.totalorder %s110, %s113
      %p122 = scmp.eq.s32.totalorder %s16, 3
      %p123 = por %p121, %p122
      %p124 = scmp.ne.s32.totalorder %s113, %s114
      %p125 = scmp.eq.s32.totalorder %s16, 0
      %p126 = por %p124, %p125
      %p127 = scmp.ne.s32.totalorder %s113, %s114
      %p128 = scmp.eq.s32.totalorder %s17, 3
      %p129 = por %p127, %p128
      %p131 = scmp.ne.s32.totalorder %s114, %s130
      %p132 = scmp.eq.s32.totalorder %s17, 0
      %p133 = por %p131, %p132
      %p134 = scmp.le.s32.totalorder 1, %s11
      %p135 = scmp.lt.s32.totalorder %s11, 5
      %p136 = pnand %p134, %p135
      %p137 = pneg %p136
      // Predicated region
      $region9: #{weight_drop_lstm_forward.1} parent=5 // pred_check
        _
      $region10: #{weight_drop_lstm_forward.1} parent=5 // pred_check_branch
        %139 = sbr.rel (%p136) target = $region12
      $region11: #{weight_drop_lstm_forward.1} parent=5 // pred_region
        %s140 = ssub.s32 %s11, 1
        // Predicated region
        $region13: #{weight_drop_lstm_forward.1} parent=11 // pred_check
          %p141 = pneg %p72
        $region14: #{weight_drop_lstm_forward.1} parent=11 // pred_check_branch
          %143 = sbr.rel (%p141) target = $region16
        $region15: #{weight_drop_lstm_forward.1} parent=11 // pred_region
          _
        $region16: #{weight_drop_lstm_forward.1} parent=11 // pred_fallthru
          _
      $region12: #{weight_drop_lstm_forward.1} parent=5 // pred_fallthru
        _
      %p144 = scmp.lt.s32.totalorder %s11, 4
      // Predicated region
      $region17: #{weight_drop_lstm_forward.1} parent=5 // pred_check
        %p145 = pneg %p144
      $region18: #{weight_drop_lstm_forward.1} parent=5 // pred_check_branch
        %147 = sbr.rel (%p145) target = $region20
      $region19: #{weight_drop_lstm_forward.1} parent=5 // pred_region
        // Predicated region
        $region21: #{weight_drop_lstm_forward.1} parent=19 // pred_check
          %p148 = pneg %p45
        $region22: #{weight_drop_lstm_forward.1} parent=19 // pred_check_branch
          %150 = sbr.rel (%p148) target = $region24
        $region23: #{weight_drop_lstm_forward.1} parent=19 // pred_region
          %s151 = smul.u32 2, %s19
          %p152 = scmp.lt.s32.totalorder %s151, 7
          %s153 = scalar_select %p152, %s151, 7
          %p154 = scmp.lt.s32.totalorder %s18, 0
          %s155 = scalar_select %p154, %s18, 0
          %s156 = sadd.s32 %s155, %s153
          %s157 = smul.addr %s156, 2
          %s158 = scalar_lea.vmem %s0, %s157
          %s159 = smul.u32 2, %s19
        $region24: #{weight_drop_lstm_forward.1} parent=19 // pred_fallthru
          _
      $region20: #{weight_drop_lstm_forward.1} parent=5 // pred_fallthru
        _
      %p160 = scmp.le.s32.totalorder 1, %s11
      %p161 = scmp.lt.s32.totalorder %s11, 5
      %p162 = pnand %p160, %p161
      %p163 = pneg %p162
      // Predicated region
      $region25: #{weight_drop_lstm_forward.1} parent=5 // pred_check
        _
      $region26: #{weight_drop_lstm_forward.1} parent=5 // pred_check_branch
        %165 = sbr.rel (%p162) target = $region28
      $region27: #{weight_drop_lstm_forward.1} parent=5 // pred_region
        %s166 = ssub.s32 %s11, 1
        %s167 = smul.u32 2, %s21
        %p168 = scmp.lt.s32.totalorder %s167, 7
        %s169 = scalar_select %p168, %s167, 7
        %p170 = scmp.lt.s32.totalorder %s20, 0
        %s171 = scalar_select %p170, %s20, 0
        %s172 = sadd.s32 %s171, %s169
        %s173 = smul.addr %s172, 2
        %s174 = scalar_lea.vmem %s0, %s173
        %p175 = pneg %p51
        %p176 = pneg %p48
        %p177 = pneg %p72
        %p178 = pneg %p69
        %p179 = pneg %p100
        %p180 = pneg %p97
        %s181 = smul.u32 2, %s21
        %p182 = scmp.lt.s32.totalorder %s181, 7
        %s183 = scalar_select %p182, %s181, 7
        %p184 = scmp.lt.s32.totalorder %s20, 0
        %s185 = scalar_select %p184, %s20, 0
        %s186 = sadd.s32 %s185, %s183
        %s187 = smul.addr %s186, 2
        %s188 = scalar_lea.vmem %s2, %s187
        %p189 = pneg %p126
        %p190 = pneg %p123
        %s191 = smul.u32 2, %s21
        %p192 = scmp.lt.s32.totalorder %s191, 7
        %s193 = scalar_select %p192, %s191, 7
        %p194 = scmp.lt.s32.totalorder %s20, 0
        %s195 = scalar_select %p194, %s20, 0
        %s196 = sadd.s32 %s195, %s193
        %s197 = smul.addr %s196, 2
        %s198 = scalar_lea.vmem %s0, %s197
        %s199 = smul.u32 2, %s21
        %s200 = smul.u32 2, %s21
        %p201 = scmp.lt.s32.totalorder %s200, 7
        %s202 = scalar_select %p201, %s200, 7
        %p203 = scmp.lt.s32.totalorder %s20, 0
        %s204 = scalar_select %p203, %s20, 0
        %s205 = sadd.s32 %s204, %s202
        %s206 = smul.addr %s205, 2
        %s207 = scalar_lea.vmem %s2, %s206
        %s208 = smul.u32 2, %s21
        %p209 = scmp.eq.s32.totalorder %s21, 0
        // Predicated region
        $region29: #{weight_drop_lstm_forward.1} parent=27 // pred_check
          %p210 = pneg %p209
        $region30: #{weight_drop_lstm_forward.1} parent=27 // pred_check_branch
          %212 = sbr.rel (%p210) target = $region32
        $region31: #{weight_drop_lstm_forward.1} parent=27 // pred_region
          %vm213 = vcmask 254976
          %214 = vst.msk [vmem:[#allocation2] sm:$0x3] %vm213, 0.0
          %215 = vst.msk [vmem:[#allocation3] sm:$0x3] %vm213, 0.0
        $region32: #{weight_drop_lstm_forward.1} parent=27 // pred_fallthru
          _
        %v216 = vld [vmem:[%s1] sm:$0xff]
        %v217 = vld [vmem:[%s1 + $0x8] sm:$0xff]
        %v218 = vld [vmem:[%s1 + $0x10] sm:$0xff]
        %v219 = vld [vmem:[%s1 + $0x18] sm:$0xff]
        %v220 = vld [vmem:[#allocation2] sm:$0x3]
        %v221 = vld [vmem:[#allocation3] sm:$0x3]
        %vm222 = vcmask 261120
        %v224 = vsel %vm222, %v220, 0
        %226 = vmatprep.subr.mxu0 0.0
        %227 = vmatpush1.msra.mxu0 %v216
        %228 = vmatprep.subr.mxu0 0.0
        %229 = vmatpush1.msra.mxu0 %v217
        %230 = vmatprep.subr.mxu0 0.0
        %231 = vmatpush1.msra.mxu0 %v218
        %232 = vmatprep.subr.mxu0 0.0
        %233 = vmatpush1.msra.mxu0 %v219
        %234 = vmatprep.subr.mxu0 0.0
        %235 = vmatpush1.msra.mxu0 0.0
        %236 = vmatprep.subr.mxu0 0.0
        %237 = vmatpush1.msra.mxu0 0.0
        %238 = vmatprep.subr.mxu0 0.0
        %239 = vmatpush1.msra.mxu0 0.0
        %240 = vmatprep.subr.mxu0 0.0
        %241 = vmatpush1.msra.mxu0 0.0
        %242 = vmatprep.subr.mxu0 0.0
        %243 = vmatpush1.msra.mxu0 0.0
        %244 = vmatprep.subr.mxu0 0.0
        %245 = vmatpush1.msra.mxu0 0.0
        %246 = vmatprep.subr.mxu0 0.0
        %247 = vmatpush1.msra.mxu0 0.0
        %248 = vmatprep.subr.mxu0 0.0
        %249 = vmatpush1.msra.mxu0 0.0
        %250 = vmatprep.subr.mxu0 0.0
        %251 = vmatpush1.msra.mxu0 0.0
        %252 = vmatprep.subr.mxu0 0.0
        %253 = vmatpush1.msra.mxu0 0.0
        %254 = vmatprep.subr.mxu0 0.0
        %255 = vmatpush1.msra.mxu0 0.0
        %256 = vmatprep.subr.mxu0 0.0
        %257 = vmatpush1.msra.mxu0 0.0
        %258 = vmatprep.subr.mxu0 0.0
        %259 = vmatpush1.msra.mxu0 0.0
        %260 = vmatprep.subr.mxu0 0.0
        %261 = vmatpush1.msra.mxu0 0.0
        %262 = vmatprep.subr.mxu0 0.0
        %263 = vmatpush1.msra.mxu0 0.0
        %264 = vmatprep.subr.mxu0 0.0
        %265 = vmatpush1.msra.mxu0 0.0
        %266 = vmatprep.subr.mxu0 0.0
        %267 = vmatpush1.msra.mxu0 0.0
        %268 = vmatprep.subr.mxu0 0.0
        %269 = vmatpush1.msra.mxu0 0.0
        %270 = vmatprep.subr.mxu0 0.0
        %271 = vmatpush1.msra.mxu0 0.0
        %272 = vmatprep.subr.mxu0 0.0
        %273 = vmatpush1.msra.mxu0 0.0
        %274 = vmatprep.subr.mxu0 0.0
        %275 = vmatpush1.msra.mxu0 0.0
        %276 = vmatprep.subr.mxu0 0.0
        %277 = vmatpush1.msra.mxu0 0.0
        %278 = vmatprep.subr.mxu0 0.0
        %279 = vmatpush1.msra.mxu0 0.0
        %280 = vmatprep.subr.mxu0 0.0
        %281 = vmatpush1.msra.mxu0 0.0
        %282 = vmatprep.subr.mxu0 0.0
        %283 = vmatpush1.msra.mxu0 0.0
        %284 = vmatprep.subr.mxu0 0.0
        %285 = vmatpush1.msra.mxu0 0.0
        %286 = vmatprep.subr.mxu0 0.0
        %287 = vmatpush1.msra.mxu0 0.0
        %288 = vmatprep.subr.mxu0 0.0
        %289 = vmatpush1.msra.mxu0 0.0
        %290 = vmatprep.mubr.f32.mxu0 0.0
        %291 = vmatmul.mubr.f32.gmra.mrb[0].mxu0 %v224
        %v292 = vpop.f32.mrb[0].mxu0
        %v293 = vadd.f32 0.0, %v292
        %v294 = vpop.f32.mrb[0].mxu0
        %295 = vdwg.mxu0
        %v296 = vld [vmem:[%s198] sm:$0x3]
        %v297 = vadd.f32 %v296, %v293
        %v298 = vxor.u32 %v297, 2147483648
        %v299 = vmul.f32 %v298, 1.442695
        %v300 = vpow.pop %v299
        %v301 = vadd.f32 %v300, 1.0
        %v302 = vrcp.pop %v301
        %v303 = vmul.f32 1.0, %v302
        %v304 = vtanh.pop %v297
        %306 = vrot.lane.b32.xlu0 %v221, 32
        %v307 = vpop.permute.xlu0 %306
        %v309 = vmul.f32 %v303, %v307
        %311 = vrot.lane.b32.xlu0 %v304, 32
        %v312 = vpop.permute.xlu0 %311
        %v314 = vmul.f32 %v303, %v312
        %316 = vrot.lane.b32.xlu0 %v314, 32
        %v317 = vpop.permute.xlu0 %316
        %v319 = vadd.f32 %v309, %v317
        %v320 = vtanh.pop %v319
        %322 = vrot.lane.b32.xlu0 %v320, 32
        %v323 = vpop.permute.xlu0 %322
        %v325 = vmul.f32 %v303, %v323
        %327 = vrot.lane.b32.xlu0 %v325, 64
        %v328 = vpop.permute.xlu0 %327
        %vm330 = vcmask 254976
        %331 = vst.msk [vmem:[%s207] sm:$0x3] %vm330, %v328
        %v332 = vsel %vm222, %v328, 0
        %334 = vmatprep.subr.mxu0 0.0
        %335 = vmatpush1.msra.mxu0 %v216
        %336 = vmatprep.subr.mxu0 0.0
        %337 = vmatpush1.msra.mxu0 %v217
        %338 = vmatprep.subr.mxu0 0.0
        %339 = vmatpush1.msra.mxu0 %v218
        %340 = vmatprep.subr.mxu0 0.0
        %341 = vmatpush1.msra.mxu0 %v219
        %342 = vmatprep.subr.mxu0 0.0
        %343 = vmatpush1.msra.mxu0 0.0
        %344 = vmatprep.subr.mxu0 0.0
        %345 = vmatpush1.msra.mxu0 0.0
        %346 = vmatprep.subr.mxu0 0.0
        %347 = vmatpush1.msra.mxu0 0.0
        %348 = vmatprep.subr.mxu0 0.0
        %349 = vmatpush1.msra.mxu0 0.0
        %350 = vmatprep.subr.mxu0 0.0
        %351 = vmatpush1.msra.mxu0 0.0
        %352 = vmatprep.subr.mxu0 0.0
        %353 = vmatpush1.msra.mxu0 0.0
        %354 = vmatprep.subr.mxu0 0.0
        %355 = vmatpush1.msra.mxu0 0.0
        %356 = vmatprep.subr.mxu0 0.0
        %357 = vmatpush1.msra.mxu0 0.0
        %358 = vmatprep.subr.mxu0 0.0
        %359 = vmatpush1.msra.mxu0 0.0
        %360 = vmatprep.subr.mxu0 0.0
        %361 = vmatpush1.msra.mxu0 0.0
        %362 = vmatprep.subr.mxu0 0.0
        %363 = vmatpush1.msra.mxu0 0.0
        %364 = vmatprep.subr.mxu0 0.0
        %365 = vmatpush1.msra.mxu0 0.0
        %366 = vmatprep.subr.mxu0 0.0
        %367 = vmatpush1.msra.mxu0 0.0
        %368 = vmatprep.subr.mxu0 0.0
        %369 = vmatpush1.msra.mxu0 0.0
        %370 = vmatprep.subr.mxu0 0.0
        %371 = vmatpush1.msra.mxu0 0.0
        %372 = vmatprep.subr.mxu0 0.0
        %373 = vmatpush1.msra.mxu0 0.0
        %374 = vmatprep.subr.mxu0 0.0
        %375 = vmatpush1.msra.mxu0 0.0
        %376 = vmatprep.subr.mxu0 0.0
        %377 = vmatpush1.msra.mxu0 0.0
        %378 = vmatprep.subr.mxu0 0.0
        %379 = vmatpush1.msra.mxu0 0.0
        %380 = vmatprep.subr.mxu0 0.0
        %381 = vmatpush1.msra.mxu0 0.0
        %382 = vmatprep.subr.mxu0 0.0
        %383 = vmatpush1.msra.mxu0 0.0
        %384 = vmatprep.subr.mxu0 0.0
        %385 = vmatpush1.msra.mxu0 0.0
        %386 = vmatprep.subr.mxu0 0.0
        %387 = vmatpush1.msra.mxu0 0.0
        %388 = vmatprep.subr.mxu0 0.0
        %389 = vmatpush1.msra.mxu0 0.0
        %390 = vmatprep.subr.mxu0 0.0
        %391 = vmatpush1.msra.mxu0 0.0
        %392 = vmatprep.subr.mxu0 0.0
        %393 = vmatpush1.msra.mxu0 0.0
        %394 = vmatprep.subr.mxu0 0.0
        %395 = vmatpush1.msra.mxu0 0.0
        %396 = vmatprep.subr.mxu0 0.0
        %397 = vmatpush1.msra.mxu0 0.0
        %398 = vmatprep.mubr.f32.mxu0 0.0
        %399 = vmatmul.mubr.f32.gmra.mrb[0].mxu0 %v332
        %v400 = vpop.f32.mrb[0].mxu0
        %v401 = vadd.f32 0.0, %v400
        %v402 = vpop.f32.mrb[0].mxu0
        %403 = vdwg.mxu0
        %s404 = scalar_lea.vmem %s198, 2
        %v405 = vld [vmem:[%s404] sm:$0x3]
        %v406 = vadd.f32 %v405, %v401
        %v407 = vxor.u32 %v406, 2147483648
        %v408 = vmul.f32 %v407, 1.442695
        %v409 = vpow.pop %v408
        %v410 = vadd.f32 %v409, 1.0
        %v411 = vrcp.pop %v410
        %v412 = vmul.f32 1.0, %v411
        %v413 = vtanh.pop %v406
        %v414 = vmul.f32 %v412, %v319
        %416 = vrot.lane.b32.xlu0 %v413, 32
        %v417 = vpop.permute.xlu0 %416
        %v419 = vmul.f32 %v412, %v417
        %421 = vrot.lane.b32.xlu0 %v419, 32
        %v422 = vpop.permute.xlu0 %421
        %v424 = vadd.f32 %v414, %v422
        %v425 = vtanh.pop %v424
        %427 = vrot.lane.b32.xlu0 %v425, 32
        %v428 = vpop.permute.xlu0 %427
        %v430 = vmul.f32 %v412, %v428
        %432 = vrot.lane.b32.xlu0 %v430, 64
        %v433 = vpop.permute.xlu0 %432
        %s435 = scalar_lea.vmem %s207, 2
        %436 = vst.msk [vmem:[%s435] sm:$0x3] %vm330, %v433
        %437 = vst.msk [vmem:[#allocation2] sm:$0x3] %vm330, %v433
        %439 = vrot.lane.b32.xlu0 %v424, 96
        %v440 = vpop.permute.xlu0 %439
        %442 = vst.msk [vmem:[#allocation3] sm:$0x3] %vm330, %v440
        %p443 = scmp.eq.s32.totalorder %s21, 3
        // Predicated region
        $region33: #{weight_drop_lstm_forward.1} parent=27 // pred_check
          %p444 = pneg %p443
        $region34: #{weight_drop_lstm_forward.1} parent=27 // pred_check_branch
          %446 = sbr.rel (%p444) target = $region36
        $region35: #{weight_drop_lstm_forward.1} parent=27 // pred_region
          %447 = vst.msk [vmem:[#allocation4] sm:$0x3] %vm330, %v440
        $region36: #{weight_drop_lstm_forward.1} parent=27 // pred_fallthru
          _
        %s448 = smul.u32 2, %s21
        %p449 = scmp.lt.s32.totalorder %s448, 7
        %s450 = scalar_select %p449, %s448, 7
        %p451 = scmp.lt.s32.totalorder %s20, 0
        %s452 = scalar_select %p451, %s20, 0
        %s453 = sadd.s32 %s452, %s450
        %s454 = smul.addr %s453, 2
        %s455 = scalar_lea.vmem %s2, %s454
        // Predicated region
        $region37: #{weight_drop_lstm_forward.1} parent=27 // pred_check
          %p456 = pneg %p97
        $region38: #{weight_drop_lstm_forward.1} parent=27 // pred_check_branch
          %458 = sbr.rel (%p456) target = $region40
        $region39: #{weight_drop_lstm_forward.1} parent=27 // pred_region
          %s459 = smul.u32 2, %s21
        $region40: #{weight_drop_lstm_forward.1} parent=27 // pred_fallthru
          _
        // Predicated region
        $region41: #{weight_drop_lstm_forward.1} parent=27 // pred_check
          %p460 = pneg %p123
        $region42: #{weight_drop_lstm_forward.1} parent=27 // pred_check_branch
          %462 = sbr.rel (%p460) target = $region44
        $region43: #{weight_drop_lstm_forward.1} parent=27 // pred_region
          %s464 = ssub.s32 32, 32
          %465 = vsyncadd [#allocation5], %s464
          %s466 = smul.addr %s20, 32
          %s467 = scalar_lea.hbm %s3, %s466
          %s469 = sshll.u32 [#allocation4], 4
          %s470 = int_to_ptr.vmem [resolvable:$true] %s469
          %472 = dma.vmem_to_hbm [thread:$0]  %s470, 32, %s467, [#allocation5]
        $region44: #{weight_drop_lstm_forward.1} parent=27 // pred_fallthru
          _
        // Predicated region
        $region45: #{weight_drop_lstm_forward.1} parent=27 // pred_check
          %p473 = pneg %p123
        $region46: #{weight_drop_lstm_forward.1} parent=27 // pred_check_branch
          %475 = sbr.rel (%p473) target = $region48
        $region47: #{weight_drop_lstm_forward.1} parent=27 // pred_region
          %476 = dma.done [#allocation5], 32
        $region48: #{weight_drop_lstm_forward.1} parent=27 // pred_fallthru
          _
      $region28: #{weight_drop_lstm_forward.1} parent=5 // pred_fallthru
        _
      %p477 = scmp.le.s32.totalorder 2, %s11
      // Predicated region
      $region49: #{weight_drop_lstm_forward.1} parent=5 // pred_check
        %p478 = pneg %p477
      $region50: #{weight_drop_lstm_forward.1} parent=5 // pred_check_branch
        %480 = sbr.rel (%p478) target = $region52
      $region51: #{weight_drop_lstm_forward.1} parent=5 // pred_region
        %s481 = ssub.s32 %s11, 2
        // Predicated region
        $region53: #{weight_drop_lstm_forward.1} parent=51 // pred_check
          %p482 = pneg %p103
        $region54: #{weight_drop_lstm_forward.1} parent=51 // pred_check_branch
          %484 = sbr.rel (%p482) target = $region56
        $region55: #{weight_drop_lstm_forward.1} parent=51 // pred_region
          %s485 = smul.u32 2, %s23
          %p486 = scmp.lt.s32.totalorder %s485, 7
          %s487 = scalar_select %p486, %s485, 7
          %p488 = scmp.lt.s32.totalorder %s22, 0
          %s489 = scalar_select %p488, %s22, 0
          %s490 = sadd.s32 %s489, %s487
          %s491 = smul.addr %s490, 2
          %s492 = scalar_lea.vmem %s2, %s491
        $region56: #{weight_drop_lstm_forward.1} parent=51 // pred_fallthru
          _
      $region52: #{weight_drop_lstm_forward.1} parent=5 // pred_fallthru
        _
    $region6: #{weight_drop_lstm_forward.1} parent=1 // loop_footer
      %s15 = sadd.s32 1, %s11
    $region7: #{weight_drop_lstm_forward.1} parent=1 // loop_footer_branch
      %10 = sbr.rel target = $region3
    $region8: #{weight_drop_lstm_forward.1} parent=1 // loop_exit
      _
    %493 = vsyncpa [#allocation5], 1
    %s494 = scalar_lea.sflag [#allocation5], 1
    %495 = vsyncpa %s494, 1

</llo_original>
